<compile_context>
chip_gen: v7x
topology: tpu7x:2x2x1
jax: 0.10.0
libtpu: 0.0.40
codegen_flags: <defaults>
</compile_context>

<pallas_src>
import math

import jax
import jax.numpy as jnp
from jax.experimental import pallas as pl
from jax.experimental.pallas import tpu as pltpu

LN_EPS = 1e-5  # PyTorch nn.LayerNorm default


def _layernorm(z, gamma, beta):
    # z is an f32 accumulator; statistics stay in f32 (two-pass form kept to
    # avoid the E[z^2]-mu^2 cancellation noted in the review).
    mu = jnp.mean(z, axis=-1, keepdims=True)
    zc = z - mu
    var = jnp.mean(zc * zc, axis=-1, keepdims=True)
    return zc * jax.lax.rsqrt(var + LN_EPS) * gamma + beta


def feedforward_kernel(x_ref, w1_ref, b1_ref, g1_ref, bt1_ref,
                       w2_ref, b2_ref, g2_ref, bt2_ref, o_ref):
    # x_ref:  (TM, dim)  native dtype
    # w1_ref: (dim, d_ff) bf16   w2_ref: (d_ff, dim) bf16
    # b1/g1/bt1: (1, d_ff) f32   b2/g2/bt2: (1, dim) f32
    # o_ref:  (TM, dim)  native dtype
    xb = x_ref[...].astype(jnp.bfloat16)                        # bf16 MXU operand

    # Linear1 + LayerNorm + SiLU (dim -> d_ff); f32 accumulation on the MXU.
    h = jnp.dot(xb, w1_ref[...], preferred_element_type=jnp.float32) + b1_ref[...]
    h = _layernorm(h, g1_ref[...], bt1_ref[...])
    h = h * jax.nn.sigmoid(h)                                   # SiLU (EUP, f32)

    # Linear2 + LayerNorm, no activation (d_ff -> dim); bf16 operands again.
    hb = h.astype(jnp.bfloat16)
    y = jnp.dot(hb, w2_ref[...], preferred_element_type=jnp.float32) + b2_ref[...]
    y = _layernorm(y, g2_ref[...], bt2_ref[...])

    o_ref[...] = y.astype(o_ref.dtype)


def _round_up(n, m):
    return ((n + m - 1) // m) * m


def _pick_tm(m, block_m):
    """Sublane-friendly row tile; ensure >=2 grid steps when M allows (v7x)."""
    tm = max(8, min(block_m, _round_up(m, 8)))
    if m > 8 and pl.cdiv(m, tm) < 2:
        tm = max(8, _round_up(pl.cdiv(m, 2), 8))
    return tm


def _vmem_limit_bytes(tm, dim, d_ff, x_bytes, out_bytes):
    """Derive a VMEM budget from actual tile sizes, capped per generation."""
    need = (
        2 * tm * dim * x_bytes                 # x tile, double-buffered
        + 2 * tm * dim * out_bytes             # out tile, double-buffered
        + 2 * (dim * d_ff + d_ff * dim)        # bf16 weights, single-buffered
        + 4 * 3 * (d_ff + dim)                 # f32 bias/gamma/beta rows
        + tm * d_ff * (4 + 2)                  # h live value (f32 + bf16 copy)
        + tm * dim * 4                         # y live value (f32)
    )
    try:
        phys = pltpu.get_tpu_info().vmem_capacity_bytes
    except Exception:
        phys = 64 * 1024 * 1024                # v7x per-TC — most conservative
    cap = (phys * 3) // 4                      # headroom for compiler scratch/spill
    return int(max(min(2 * need + (4 << 20), cap), min(32 << 20, cap)))


def feed_forward(x, w1, b1, g1, beta1, w2, b2, g2, beta2, *, block_m=512):
    """x: (..., dim). w1: (d_ff, dim), w2: (dim, d_ff) in PyTorch nn.Linear layout."""
    orig_shape = x.shape
    dim = orig_shape[-1]
    d_ff = w1.shape[0]
    M = math.prod(orig_shape[:-1])

    x2 = x.reshape(M, dim)                     # native dtype, no f32 materialization

    tm = _pick_tm(M, block_m)
    grid_m = pl.cdiv(M, tm)                    # partial tail block masked by Pallas

    # Transpose + cast weights once in the wrapper so the kernel is x @ W (bf16).
    w1t = jnp.asarray(w1, jnp.bfloat16).T      # (dim, d_ff)
    w2t = jnp.asarray(w2, jnp.bfloat16).T      # (d_ff, dim)
    row = lambda v: jnp.asarray(v, jnp.float32).reshape(1, -1)

    # Constant-index operands: resident in VMEM, single-buffered.
    resident = lambda shape: pl.BlockSpec(shape, lambda i: (0, 0),
                                          pipeline_mode=pl.Buffered(1))

    itemsize = jnp.dtype(x.dtype).itemsize
    out = pl.pallas_call(
        feedforward_kernel,
        out_shape=jax.ShapeDtypeStruct((M, dim), x.dtype),
        grid_spec=pltpu.PrefetchScalarGridSpec(
            num_scalar_prefetch=0,
            grid=(grid_m,),
            in_specs=[
                pl.BlockSpec((tm, dim), lambda i: (i, 0)),     # x row tile
                resident((dim, d_ff)),                         # W1 (bf16, resident)
                resident((1, d_ff)),                           # b1
                resident((1, d_ff)),                           # gamma1
                resident((1, d_ff)),                           # beta1
                resident((d_ff, dim)),                         # W2 (bf16, resident)
                resident((1, dim)),                            # b2
                resident((1, dim)),                            # gamma2
                resident((1, dim)),                            # beta2
            ],
            out_specs=pl.BlockSpec((tm, dim), lambda i: (i, 0)),
        ),
        compiler_params=pltpu.CompilerParams(
            dimension_semantics=("parallel",),
            vmem_limit_bytes=_vmem_limit_bytes(tm, dim, d_ff, itemsize, itemsize),
        ),
    )(x2, w1t, row(b1), row(g1), row(beta1), w2t, row(b2), row(g2), row(beta2))

    return out.reshape(orig_shape)


def feed_forward_ref(x, w1, b1, g1, beta1, w2, b2, g2, beta2):
    """Pure-JAX reference of the PyTorch FeedForward.forward."""
    def ln(z, g, b):
        mu = jnp.mean(z, axis=-1, keepdims=True)
        var = jnp.mean((z - mu) ** 2, axis=-1, keepdims=True)
        return (z - mu) / jnp.sqrt(var + LN_EPS) * g + b

    h = x @ w1.T + b1
    h = ln(h, g1, beta1)
    h = h * jax.nn.sigmoid(h)
    y = h @ w2.T + b2
    return ln(y, g2, beta2)


if __name__ == "__main__":
    key = jax.random.PRNGKey(0)
    ks = jax.random.split(key, 9)

    # Small, TPU-friendly shapes consistent with the module: x (batch, seq, dim).
    batch, seq, dim, d_ff = 2, 8, 128, 256
    x = jax.random.normal(ks[0], (batch, seq, dim), dtype=jnp.float32)

    # nn.Linear layout: weight (out_features, in_features), bias (out_features,)
    w1 = jax.random.normal(ks[1], (d_ff, dim), dtype=jnp.float32) * 0.05
    b1 = jax.random.normal(ks[2], (d_ff,), dtype=jnp.float32) * 0.1
    g1 = jax.random.normal(ks[3], (d_ff,), dtype=jnp.float32) * 0.1 + 1.0
    beta1 = jax.random.normal(ks[4], (d_ff,), dtype=jnp.float32) * 0.1

    w2 = jax.random.normal(ks[5], (dim, d_ff), dtype=jnp.float32) * 0.05
    b2 = jax.random.normal(ks[6], (dim,), dtype=jnp.float32) * 0.1
    g2 = jax.random.normal(ks[7], (dim,), dtype=jnp.float32) * 0.1 + 1.0
    beta2 = jax.random.normal(ks[8], (dim,), dtype=jnp.float32) * 0.1

    out = feed_forward(x, w1, b1, g1, beta1, w2, b2, g2, beta2)
    out = jax.block_until_ready(out)

    ref = feed_forward_ref(x, w1, b1, g1, beta1, w2, b2, g2, beta2)
    assert out.shape == (batch, seq, dim)
    # Tolerance reflects bf16 MXU operands with f32 accumulation.
    assert jnp.allclose(out, ref, atol=5e-2, rtol=5e-2), (
        float(jnp.max(jnp.abs(out - ref))))

    print("KERNEL_OK")
</pallas_src>

<mosaic_0001>
module attributes {stable_mosaic.version = 11 : i64} {
  func.func @feedforward_kernel(%arg0: i32, %arg1: memref<8x128xf32, #tpu.memory_space<vmem>>, %arg2: memref<128x256xbf16, #tpu.memory_space<vmem>>, %arg3: memref<1x256xf32, #tpu.memory_space<vmem>>, %arg4: memref<1x256xf32, #tpu.memory_space<vmem>>, %arg5: memref<1x256xf32, #tpu.memory_space<vmem>>, %arg6: memref<256x128xbf16, #tpu.memory_space<vmem>>, %arg7: memref<1x128xf32, #tpu.memory_space<vmem>>, %arg8: memref<1x128xf32, #tpu.memory_space<vmem>>, %arg9: memref<1x128xf32, #tpu.memory_space<vmem>>, %arg10: memref<8x128xf32, #tpu.memory_space<vmem>>) attributes {dimension_semantics = [#tpu.dimension_semantics<parallel>], iteration_bounds = array<i64: 2>, scalar_prefetch = 0 : i64, scratch_operands = 0 : i64, tpu.core_type = #tpu.core_type<tc>, window_params = [{transform_indices = @transform_0, window_bounds = array<i64: 8, 128>}, {pipeline_mode = #tpu.pipeline_mode<synchronous>, transform_indices = @transform_1, window_bounds = array<i64: 128, 256>}, {pipeline_mode = #tpu.pipeline_mode<synchronous>, transform_indices = @transform_2, window_bounds = array<i64: 1, 256>}, {pipeline_mode = #tpu.pipeline_mode<synchronous>, transform_indices = @transform_3, window_bounds = array<i64: 1, 256>}, {pipeline_mode = #tpu.pipeline_mode<synchronous>, transform_indices = @transform_4, window_bounds = array<i64: 1, 256>}, {pipeline_mode = #tpu.pipeline_mode<synchronous>, transform_indices = @transform_5, window_bounds = array<i64: 256, 128>}, {pipeline_mode = #tpu.pipeline_mode<synchronous>, transform_indices = @transform_6, window_bounds = array<i64: 1, 128>}, {pipeline_mode = #tpu.pipeline_mode<synchronous>, transform_indices = @transform_7, window_bounds = array<i64: 1, 128>}, {pipeline_mode = #tpu.pipeline_mode<synchronous>, transform_indices = @transform_8, window_bounds = array<i64: 1, 128>}, {transform_indices = @transform_9, window_bounds = array<i64: 8, 128>}]} {
    %c0 = arith.constant 0 : index
    %c0_0 = arith.constant 0 : index
    %0 = vector.load %arg1[%c0, %c0_0] : memref<8x128xf32, #tpu.memory_space<vmem>>, vector<8x128xf32>
    %1 = arith.truncf %0 : vector<8x128xf32> to vector<8x128xbf16>
    %c0_1 = arith.constant 0 : index
    %c0_2 = arith.constant 0 : index
    %2 = vector.load %arg2[%c0_1, %c0_2] : memref<128x256xbf16, #tpu.memory_space<vmem>>, vector<128x256xbf16>
    %cst = arith.constant dense<0.000000e+00> : vector<8x256xf32>
    %3 = tpu.matmul %1, %2, %cst {dimension_numbers = #tpu.dot_dimension_numbers<[1], [0], [0], [1], [0, 0, 1, 1], [], []>} : vector<8x128xbf16>, vector<128x256xbf16>, vector<8x256xf32> -> vector<8x256xf32>
    %c0_3 = arith.constant 0 : index
    %c0_4 = arith.constant 0 : index
    %4 = vector.load %arg3[%c0_3, %c0_4] : memref<1x256xf32, #tpu.memory_space<vmem>>, vector<1x256xf32>
    %5 = vector.broadcast %4 : vector<1x256xf32> to vector<8x256xf32>
    %6 = arith.addf %3, %5 : vector<8x256xf32>
    %c0_5 = arith.constant 0 : index
    %c0_6 = arith.constant 0 : index
    %7 = vector.load %arg4[%c0_5, %c0_6] : memref<1x256xf32, #tpu.memory_space<vmem>>, vector<1x256xf32>
    %c0_7 = arith.constant 0 : index
    %c0_8 = arith.constant 0 : index
    %8 = vector.load %arg5[%c0_7, %c0_8] : memref<1x256xf32, #tpu.memory_space<vmem>>, vector<1x256xf32>
    %cst_9 = arith.constant dense<0.000000e+00> : vector<8xf32>
    %9 = vector.multi_reduction <add>, %6, %cst_9 [1] : vector<8x256xf32> to vector<8xf32>
    %10 = vector.shape_cast %9 : vector<8xf32> to vector<8x1xf32>
    %cst_10 = arith.constant 2.560000e+02 : f32
    %11 = vector.broadcast %cst_10 : f32 to vector<8x1xf32>
    %12 = arith.divf %10, %11 : vector<8x1xf32>
    %13 = vector.broadcast %12 : vector<8x1xf32> to vector<8x256xf32>
    %14 = arith.subf %6, %13 : vector<8x256xf32>
    %15 = arith.mulf %14, %14 : vector<8x256xf32>
    %cst_11 = arith.constant dense<0.000000e+00> : vector<8xf32>
    %16 = vector.multi_reduction <add>, %15, %cst_11 [1] : vector<8x256xf32> to vector<8xf32>
    %17 = vector.shape_cast %16 : vector<8xf32> to vector<8x1xf32>
    %cst_12 = arith.constant 2.560000e+02 : f32
    %18 = vector.broadcast %cst_12 : f32 to vector<8x1xf32>
    %19 = arith.divf %17, %18 : vector<8x1xf32>
    %cst_13 = arith.constant 9.99999974E-6 : f32
    %20 = vector.broadcast %cst_13 : f32 to vector<8x1xf32>
    %21 = arith.addf %19, %20 : vector<8x1xf32>
    %22 = math.rsqrt %21 : vector<8x1xf32>
    %23 = vector.broadcast %22 : vector<8x1xf32> to vector<8x256xf32>
    %24 = arith.mulf %14, %23 : vector<8x256xf32>
    %25 = vector.broadcast %7 : vector<1x256xf32> to vector<8x256xf32>
    %26 = arith.mulf %24, %25 : vector<8x256xf32>
    %27 = vector.broadcast %8 : vector<1x256xf32> to vector<8x256xf32>
    %28 = arith.addf %26, %27 : vector<8x256xf32>
    %29 = arith.negf %28 : vector<8x256xf32>
    %30 = math.exp %29 : vector<8x256xf32>
    %cst_14 = arith.constant 1.000000e+00 : f32
    %31 = vector.broadcast %cst_14 : f32 to vector<8x256xf32>
    %32 = arith.addf %31, %30 : vector<8x256xf32>
    %33 = arith.divf %31, %32 : vector<8x256xf32>
    %34 = arith.mulf %28, %33 : vector<8x256xf32>
    %35 = arith.truncf %34 : vector<8x256xf32> to vector<8x256xbf16>
    %c0_15 = arith.constant 0 : index
    %c0_16 = arith.constant 0 : index
    %36 = vector.load %arg6[%c0_15, %c0_16] : memref<256x128xbf16, #tpu.memory_space<vmem>>, vector<256x128xbf16>
    %cst_17 = arith.constant dense<0.000000e+00> : vector<8x128xf32>
    %37 = tpu.matmul %35, %36, %cst_17 {dimension_numbers = #tpu.dot_dimension_numbers<[1], [0], [0], [1], [0, 0, 1, 1], [], []>} : vector<8x256xbf16>, vector<256x128xbf16>, vector<8x128xf32> -> vector<8x128xf32>
    %c0_18 = arith.constant 0 : index
    %c0_19 = arith.constant 0 : index
    %38 = vector.load %arg7[%c0_18, %c0_19] : memref<1x128xf32, #tpu.memory_space<vmem>>, vector<1x128xf32>
    %39 = vector.broadcast %38 : vector<1x128xf32> to vector<8x128xf32>
    %40 = arith.addf %37, %39 : vector<8x128xf32>
    %c0_20 = arith.constant 0 : index
    %c0_21 = arith.constant 0 : index
    %41 = vector.load %arg8[%c0_20, %c0_21] : memref<1x128xf32, #tpu.memory_space<vmem>>, vector<1x128xf32>
    %c0_22 = arith.constant 0 : index
    %c0_23 = arith.constant 0 : index
    %42 = vector.load %arg9[%c0_22, %c0_23] : memref<1x128xf32, #tpu.memory_space<vmem>>, vector<1x128xf32>
    %cst_24 = arith.constant dense<0.000000e+00> : vector<8xf32>
    %43 = vector.multi_reduction <add>, %40, %cst_24 [1] : vector<8x128xf32> to vector<8xf32>
    %44 = vector.shape_cast %43 : vector<8xf32> to vector<8x1xf32>
    %cst_25 = arith.constant 1.280000e+02 : f32
    %45 = vector.broadcast %cst_25 : f32 to vector<8x1xf32>
    %46 = arith.divf %44, %45 : vector<8x1xf32>
    %47 = vector.broadcast %46 : vector<8x1xf32> to vector<8x128xf32>
    %48 = arith.subf %40, %47 : vector<8x128xf32>
    %49 = arith.mulf %48, %48 : vector<8x128xf32>
    %cst_26 = arith.constant dense<0.000000e+00> : vector<8xf32>
    %50 = vector.multi_reduction <add>, %49, %cst_26 [1] : vector<8x128xf32> to vector<8xf32>
    %51 = vector.shape_cast %50 : vector<8xf32> to vector<8x1xf32>
    %cst_27 = arith.constant 1.280000e+02 : f32
    %52 = vector.broadcast %cst_27 : f32 to vector<8x1xf32>
    %53 = arith.divf %51, %52 : vector<8x1xf32>
    %cst_28 = arith.constant 9.99999974E-6 : f32
    %54 = vector.broadcast %cst_28 : f32 to vector<8x1xf32>
    %55 = arith.addf %53, %54 : vector<8x1xf32>
    %56 = math.rsqrt %55 : vector<8x1xf32>
    %57 = vector.broadcast %56 : vector<8x1xf32> to vector<8x128xf32>
    %58 = arith.mulf %48, %57 : vector<8x128xf32>
    %59 = vector.broadcast %41 : vector<1x128xf32> to vector<8x128xf32>
    %60 = arith.mulf %58, %59 : vector<8x128xf32>
    %61 = vector.broadcast %42 : vector<1x128xf32> to vector<8x128xf32>
    %62 = arith.addf %60, %61 : vector<8x128xf32>
    %c0_29 = arith.constant 0 : index
    %c0_30 = arith.constant 0 : index
    %63 = vector.load %arg10[%c0_29, %c0_30] : memref<8x128xf32, #tpu.memory_space<vmem>>, vector<8x128xf32>
    tpu.vector_store %arg10[%c0_29, %c0_30], %62 {strides = array<i32>} : memref<8x128xf32, #tpu.memory_space<vmem>>, vector<8x128xf32>,
    return
  }
  func.func @transform_0(%arg0: i32) -> (i32, i32) {
    %c0_i32 = arith.constant 0 : i32
    %c0_i32_0 = arith.constant 0 : i32
    return %arg0, %c0_i32 : i32, i32
  }
  func.func @transform_1(%arg0: i32) -> (i32, i32) {
    %c0_i32 = arith.constant 0 : i32
    %c0_i32_0 = arith.constant 0 : i32
    %c0_i32_1 = arith.constant 0 : i32
    return %c0_i32, %c0_i32_0 : i32, i32
  }
  func.func @transform_2(%arg0: i32) -> (i32, i32) {
    %c0_i32 = arith.constant 0 : i32
    %c0_i32_0 = arith.constant 0 : i32
    %c0_i32_1 = arith.constant 0 : i32
    return %c0_i32, %c0_i32_0 : i32, i32
  }
  func.func @transform_3(%arg0: i32) -> (i32, i32) {
    %c0_i32 = arith.constant 0 : i32
    %c0_i32_0 = arith.constant 0 : i32
    %c0_i32_1 = arith.constant 0 : i32
    return %c0_i32, %c0_i32_0 : i32, i32
  }
  func.func @transform_4(%arg0: i32) -> (i32, i32) {
    %c0_i32 = arith.constant 0 : i32
    %c0_i32_0 = arith.constant 0 : i32
    %c0_i32_1 = arith.constant 0 : i32
    return %c0_i32, %c0_i32_0 : i32, i32
  }
  func.func @transform_5(%arg0: i32) -> (i32, i32) {
    %c0_i32 = arith.constant 0 : i32
    %c0_i32_0 = arith.constant 0 : i32
    %c0_i32_1 = arith.constant 0 : i32
    return %c0_i32, %c0_i32_0 : i32, i32
  }
  func.func @transform_6(%arg0: i32) -> (i32, i32) {
    %c0_i32 = arith.constant 0 : i32
    %c0_i32_0 = arith.constant 0 : i32
    %c0_i32_1 = arith.constant 0 : i32
    return %c0_i32, %c0_i32_0 : i32, i32
  }
  func.func @transform_7(%arg0: i32) -> (i32, i32) {
    %c0_i32 = arith.constant 0 : i32
    %c0_i32_0 = arith.constant 0 : i32
    %c0_i32_1 = arith.constant 0 : i32
    return %c0_i32, %c0_i32_0 : i32, i32
  }
  func.func @transform_8(%arg0: i32) -> (i32, i32) {
    %c0_i32 = arith.constant 0 : i32
    %c0_i32_0 = arith.constant 0 : i32
    %c0_i32_1 = arith.constant 0 : i32
    return %c0_i32, %c0_i32_0 : i32, i32
  }
  func.func @transform_9(%arg0: i32) -> (i32, i32) {
    %c0_i32 = arith.constant 0 : i32
    %c0_i32_0 = arith.constant 0 : i32
    return %arg0, %c0_i32 : i32, i32
  }
}

</mosaic_0001>

<llo_original>
// kernel: tpu_custom_call.1
$region0: #{tpu_custom_call.1}
  #allocation0 [shape = 'u32[]', space=smem, size = 0x4, offset = 0x4, fixed_abs, tag = 'smem constant byte address 0x4 - core index']
  #allocation1 [shape = 'u32[144,128]{1,0:T(1,128)}', space=vmem, size = 0x12000, scoped, tag = 'internal scratch']
  %s0 = inlined_call_operand.hbm [shape: f32[16,128], index: 0, kind: input, shape index: {}]
  %s1 = inlined_call_operand.hbm [shape: bf16[128,256], index: 1, kind: input, shape index: {}]
  %s2 = inlined_call_operand.vmem [shape: f32[1,256], index: 2, kind: input, shape index: {}]
  %s3 = inlined_call_operand.vmem [shape: f32[1,256], index: 3, kind: input, shape index: {}]
  %s4 = inlined_call_operand.vmem [shape: f32[1,256], index: 4, kind: input, shape index: {}]
  %s5 = inlined_call_operand.hbm [shape: bf16[256,128], index: 5, kind: input, shape index: {}]
  %s6 = inlined_call_operand.vmem [shape: f32[1,128], index: 6, kind: input, shape index: {}]
  %s7 = inlined_call_operand.vmem [shape: f32[1,128], index: 7, kind: input, shape index: {}]
  %s8 = inlined_call_operand.vmem [shape: f32[1,128], index: 8, kind: input, shape index: {}]
  %s9 = inlined_call_operand.hbm [shape: f32[16,128], index: 9, kind: output, shape index: {}]
  %s10 = sld [smem:[#allocation0]]
  $region81: #{tpu_custom_call.1} parent=0
    _
  %s12 = ssub.s32 1, %s10
  %s13 = scalar_select 0, %s12, %s10
  $region1: #{tpu_custom_call.1} parent=0
    #allocation2 [shape = 'u8[8192]{0}', space=vmem, size = 0x2000, scoped, tag = 'input window, operand 0']
    #allocation3 [shape = 's32[2]{0}', space=sflag, size = 0x8, scoped, tag = 'scoped memory for tpu_custom_call.1']
    #allocation4 [shape = 's32[2]{0}', space=sflag, size = 0x8, scoped, tag = 'scoped memory for tpu_custom_call.1']
    #allocation5 [shape = 'u8[65536]{0}', space=vmem, size = 0x10000, scoped, tag = 'input window, operand 1, single buffered']
    #allocation6 [shape = 's32[1]{0}', space=sflag, size = 0x4, scoped, tag = 'scoped memory for tpu_custom_call.1']
    #allocation7 [shape = 'u8[65536]{0}', space=vmem, size = 0x10000, scoped, tag = 'input window, operand 5, single buffered']
    #allocation8 [shape = 'u8[8192]{0}', space=vmem, size = 0x2000, scoped, tag = 'output window, operand 0']
    %14 = vsyncpa [#allocation3], 0
    %s15 = scalar_lea.sflag [#allocation3], 1
    %16 = vsyncpa %s15, 0
    %17 = vsyncpa [#allocation6], 0
    %18 = vsyncpa [#allocation4], 0
    %s19 = scalar_lea.sflag [#allocation4], 1
    %20 = vsyncpa %s19, 0
    loop: start=0, step=1, limit=4
    $region2: #{tpu_custom_call.1} parent=1 // loop_pre_header
      _
    $region3: #{tpu_custom_call.1} parent=1 // loop_header
      %s22 = sphi 0, %s26
      %p23 = scmp.ge.s32.totalorder %s22, 4
      %s32 = sphi 0, %s34
      %s35 = sphi 0, %s32
      %s36 = sphi 0, %s35
      %s52 = sphi 0, %s36
      %s56 = sphi 0, %s56
      %s58 = sphi 0, %s56
      %s59 = sphi 0, %s58
      %s73 = sphi 0, %s59
      %s77 = sphi 0, %s77
      %s79 = sphi 0, %s77
      %s80 = sphi 0, %s79
      %s94 = sphi 0, %s80
      %s98 = sphi 0, %s98
      %s100 = sphi 0, %s98
      %s101 = sphi 0, %s100
      %s115 = sphi 0, %s101
      %s119 = sphi 0, %s119
      %s121 = sphi 0, %s119
      %s122 = sphi 0, %s121
      %s136 = sphi 0, %s122
      %s140 = sphi 0, %s140
      %s142 = sphi 0, %s140
      %s143 = sphi 0, %s142
      %s157 = sphi 0, %s143
      %s161 = sphi 0, %s161
      %s163 = sphi 0, %s161
      %s164 = sphi 0, %s163
      %s178 = sphi 0, %s164
      %s182 = sphi 0, %s182
      %s184 = sphi 0, %s182
      %s185 = sphi 0, %s184
      %s199 = sphi 0, %s185
      %s203 = sphi 0, %s203
      %s205 = sphi 0, %s203
      %s206 = sphi 0, %s205
      %s220 = sphi 0, %s206
      %s226 = sphi 0, %s228
      %s229 = sphi 0, %s226
      %s230 = sphi 0, %s229
      %s246 = sphi 0, %s230
    $region4: #{tpu_custom_call.1} parent=1 // loop_header_branch
      %25 = sbr.rel (%p23) target = $region8
    $region5: #{tpu_custom_call.1} parent=1 // loop_body
      %s27 = ssub.s32 %s22, 1
      %s28 = ssub.s32 %s22, 2
      %s29 = sadd.s32 %s22, 1
      %s30 = ssub.s32 %s22, %s29
      %p31 = scmp.eq.s32.totalorder %s30, 0
      %s33 = sadd.s32 %s32, 1
      %s34 = scalar_select %p31, %s32, %s33
      %p37 = pneg %p31
      %p38 = scmp.eq.s32.totalorder %s22, 1
      %p39 = por %p37, %p38
      %p40 = scmp.ne.s32.totalorder %s32, %s35
      %p41 = scmp.eq.s32.totalorder %s22, 0
      %p42 = por %p40, %p41
      %p43 = scmp.ne.s32.totalorder %s32, %s35
      %p44 = scmp.eq.s32.totalorder %s27, 1
      %p45 = por %p43, %p44
      %p46 = scmp.ne.s32.totalorder %s35, %s36
      %p47 = scmp.eq.s32.totalorder %s27, 0
      %p48 = por %p46, %p47
      %p49 = scmp.ne.s32.totalorder %s35, %s36
      %p50 = scmp.eq.s32.totalorder %s28, 1
      %p51 = por %p49, %p50
      %p53 = scmp.ne.s32.totalorder %s36, %s52
      %p54 = scmp.eq.s32.totalorder %s28, 0
      %p55 = por %p53, %p54
      %s57 = sadd.s32 %s56, 1
      %p60 = scmp.eq.s32.totalorder %s22, 1
      %p61 = scmp.ne.s32.totalorder %s56, %s58
      %p62 = scmp.eq.s32.totalorder %s22, 0
      %p63 = por %p61, %p62
      %p64 = scmp.ne.s32.totalorder %s56, %s58
      %p65 = scmp.eq.s32.totalorder %s27, 1
      %p66 = por %p64, %p65
      %p67 = scmp.ne.s32.totalorder %s58, %s59
      %p68 = scmp.eq.s32.totalorder %s27, 0
      %p69 = por %p67, %p68
      %p70 = scmp.ne.s32.totalorder %s58, %s59
      %p71 = scmp.eq.s32.totalorder %s28, 1
      %p72 = por %p70, %p71
      %p74 = scmp.ne.s32.totalorder %s59, %s73
      %p75 = scmp.eq.s32.totalorder %s28, 0
      %p76 = por %p74, %p75
      %s78 = sadd.s32 %s77, 1
      %p81 = scmp.eq.s32.totalorder %s22, 1
      %p82 = scmp.ne.s32.totalorder %s77, %s79
      %p83 = scmp.eq.s32.totalorder %s22, 0
      %p84 = por %p82, %p83
      %p85 = scmp.ne.s32.totalorder %s77, %s79
      %p86 = scmp.eq.s32.totalorder %s27, 1
      %p87 = por %p85, %p86
      %p88 = scmp.ne.s32.totalorder %s79, %s80
      %p89 = scmp.eq.s32.totalorder %s27, 0
      %p90 = por %p88, %p89
      %p91 = scmp.ne.s32.totalorder %s79, %s80
      %p92 = scmp.eq.s32.totalorder %s28, 1
      %p93 = por %p91, %p92
      %p95 = scmp.ne.s32.totalorder %s80, %s94
      %p96 = scmp.eq.s32.totalorder %s28, 0
      %p97 = por %p95, %p96
      %s99 = sadd.s32 %s98, 1
      %p102 = scmp.eq.s32.totalorder %s22, 1
      %p103 = scmp.ne.s32.totalorder %s98, %s100
      %p104 = scmp.eq.s32.totalorder %s22, 0
      %p105 = por %p103, %p104
      %p106 = scmp.ne.s32.totalorder %s98, %s100
      %p107 = scmp.eq.s32.totalorder %s27, 1
      %p108 = por %p106, %p107
      %p109 = scmp.ne.s32.totalorder %s100, %s101
      %p110 = scmp.eq.s32.totalorder %s27, 0
      %p111 = por %p109, %p110
      %p112 = scmp.ne.s32.totalorder %s100, %s101
      %p113 = scmp.eq.s32.totalorder %s28, 1
      %p114 = por %p112, %p113
      %p116 = scmp.ne.s32.totalorder %s101, %s115
      %p117 = scmp.eq.s32.totalorder %s28, 0
      %p118 = por %p116, %p117
      %s120 = sadd.s32 %s119, 1
      %p123 = scmp.eq.s32.totalorder %s22, 1
      %p124 = scmp.ne.s32.totalorder %s119, %s121
      %p125 = scmp.eq.s32.totalorder %s22, 0
      %p126 = por %p124, %p125
      %p127 = scmp.ne.s32.totalorder %s119, %s121
      %p128 = scmp.eq.s32.totalorder %s27, 1
      %p129 = por %p127, %p128
      %p130 = scmp.ne.s32.totalorder %s121, %s122
      %p131 = scmp.eq.s32.totalorder %s27, 0
      %p132 = por %p130, %p131
      %p133 = scmp.ne.s32.totalorder %s121, %s122
      %p134 = scmp.eq.s32.totalorder %s28, 1
      %p135 = por %p133, %p134
      %p137 = scmp.ne.s32.totalorder %s122, %s136
      %p138 = scmp.eq.s32.totalorder %s28, 0
      %p139 = por %p137, %p138
      %s141 = sadd.s32 %s140, 1
      %p144 = scmp.eq.s32.totalorder %s22, 1
      %p145 = scmp.ne.s32.totalorder %s140, %s142
      %p146 = scmp.eq.s32.totalorder %s22, 0
      %p147 = por %p145, %p146
      %p148 = scmp.ne.s32.totalorder %s140, %s142
      %p149 = scmp.eq.s32.totalorder %s27, 1
      %p150 = por %p148, %p149
      %p151 = scmp.ne.s32.totalorder %s142, %s143
      %p152 = scmp.eq.s32.totalorder %s27, 0
      %p153 = por %p151, %p152
      %p154 = scmp.ne.s32.totalorder %s142, %s143
      %p155 = scmp.eq.s32.totalorder %s28, 1
      %p156 = por %p154, %p155
      %p158 = scmp.ne.s32.totalorder %s143, %s157
      %p159 = scmp.eq.s32.totalorder %s28, 0
      %p160 = por %p158, %p159
      %s162 = sadd.s32 %s161, 1
      %p165 = scmp.eq.s32.totalorder %s22, 1
      %p166 = scmp.ne.s32.totalorder %s161, %s163
      %p167 = scmp.eq.s32.totalorder %s22, 0
      %p168 = por %p166, %p167
      %p169 = scmp.ne.s32.totalorder %s161, %s163
      %p170 = scmp.eq.s32.totalorder %s27, 1
      %p171 = por %p169, %p170
      %p172 = scmp.ne.s32.totalorder %s163, %s164
      %p173 = scmp.eq.s32.totalorder %s27, 0
      %p174 = por %p172, %p173
      %p175 = scmp.ne.s32.totalorder %s163, %s164
      %p176 = scmp.eq.s32.totalorder %s28, 1
      %p177 = por %p175, %p176
      %p179 = scmp.ne.s32.totalorder %s164, %s178
      %p180 = scmp.eq.s32.totalorder %s28, 0
      %p181 = por %p179, %p180
      %s183 = sadd.s32 %s182, 1
      %p186 = scmp.eq.s32.totalorder %s22, 1
      %p187 = scmp.ne.s32.totalorder %s182, %s184
      %p188 = scmp.eq.s32.totalorder %s22, 0
      %p189 = por %p187, %p188
      %p190 = scmp.ne.s32.totalorder %s182, %s184
      %p191 = scmp.eq.s32.totalorder %s27, 1
      %p192 = por %p190, %p191
      %p193 = scmp.ne.s32.totalorder %s184, %s185
      %p194 = scmp.eq.s32.totalorder %s27, 0
      %p195 = por %p193, %p194
      %p196 = scmp.ne.s32.totalorder %s184, %s185
      %p197 = scmp.eq.s32.totalorder %s28, 1
      %p198 = por %p196, %p197
      %p200 = scmp.ne.s32.totalorder %s185, %s199
      %p201 = scmp.eq.s32.totalorder %s28, 0
      %p202 = por %p200, %p201
      %s204 = sadd.s32 %s203, 1
      %p207 = scmp.eq.s32.totalorder %s22, 1
      %p208 = scmp.ne.s32.totalorder %s203, %s205
      %p209 = scmp.eq.s32.totalorder %s22, 0
      %p210 = por %p208, %p209
      %p211 = scmp.ne.s32.totalorder %s203, %s205
      %p212 = scmp.eq.s32.totalorder %s27, 1
      %p213 = por %p211, %p212
      %p214 = scmp.ne.s32.totalorder %s205, %s206
      %p215 = scmp.eq.s32.totalorder %s27, 0
      %p216 = por %p214, %p215
      %p217 = scmp.ne.s32.totalorder %s205, %s206
      %p218 = scmp.eq.s32.totalorder %s28, 1
      %p219 = por %p217, %p218
      %p221 = scmp.ne.s32.totalorder %s206, %s220
      %p222 = scmp.eq.s32.totalorder %s28, 0
      %p223 = por %p221, %p222
      %s224 = ssub.s32 %s22, %s29
      %p225 = scmp.eq.s32.totalorder %s224, 0
      %s227 = sadd.s32 %s226, 1
      %s228 = scalar_select %p225, %s226, %s227
      %p231 = pneg %p225
      %p232 = scmp.eq.s32.totalorder %s22, 1
      %p233 = por %p231, %p232
      %p234 = scmp.ne.s32.totalorder %s226, %s229
      %p235 = scmp.eq.s32.totalorder %s22, 0
      %p236 = por %p234, %p235
      %p237 = scmp.ne.s32.totalorder %s226, %s229
      %p238 = scmp.eq.s32.totalorder %s27, 1
      %p239 = por %p237, %p238
      %p240 = scmp.ne.s32.totalorder %s229, %s230
      %p241 = scmp.eq.s32.totalorder %s27, 0
      %p242 = por %p240, %p241
      %p243 = scmp.ne.s32.totalorder %s229, %s230
      %p244 = scmp.eq.s32.totalorder %s28, 1
      %p245 = por %p243, %p244
      %p247 = scmp.ne.s32.totalorder %s230, %s246
      %p248 = scmp.eq.s32.totalorder %s28, 0
      %p249 = por %p247, %p248
      %p250 = scmp.le.s32.totalorder 1, %s22
      %p251 = scmp.lt.s32.totalorder %s22, 3
      %p252 = pnand %p250, %p251
      %p253 = pneg %p252
      // Predicated region
      $region9: #{tpu_custom_call.1} parent=5 // pred_check
        _
      $region10: #{tpu_custom_call.1} parent=5 // pred_check_branch
        %255 = sbr.rel (%p252) target = $region12
      $region11: #{tpu_custom_call.1} parent=5 // pred_region
        %s256 = ssub.s32 %s22, 1
        // Predicated region
        $region13: #{tpu_custom_call.1} parent=11 // pred_check
          %p257 = pneg %p69
        $region14: #{tpu_custom_call.1} parent=11 // pred_check_branch
          %259 = sbr.rel (%p257) target = $region16
        $region15: #{tpu_custom_call.1} parent=11 // pred_region
          %s261 = ssub.s32 2048, 2048
          %262 = vsyncadd [#allocation6], %s261
          %s263 = sshll.u32 [#allocation5], 4
          %s264 = int_to_ptr.vmem [resolvable:$true] %s263
          %269 = dma.hbm_to_vmem [thread:$0]  %s1, 2048, %s264, [#allocation6], 128, 128, 8
        $region16: #{tpu_custom_call.1} parent=11 // pred_fallthru
          _
        // Predicated region
        $region17: #{tpu_custom_call.1} parent=11 // pred_check
          %p270 = pneg %p90
        $region18: #{tpu_custom_call.1} parent=11 // pred_check_branch
          %272 = sbr.rel (%p270) target = $region20
        $region19: #{tpu_custom_call.1} parent=11 // pred_region
          _
        $region20: #{tpu_custom_call.1} parent=11 // pred_fallthru
          _
        // Predicated region
        $region21: #{tpu_custom_call.1} parent=11 // pred_check
          %p273 = pneg %p111
        $region22: #{tpu_custom_call.1} parent=11 // pred_check_branch
          %275 = sbr.rel (%p273) target = $region24
        $region23: #{tpu_custom_call.1} parent=11 // pred_region
          _
        $region24: #{tpu_custom_call.1} parent=11 // pred_fallthru
          _
        // Predicated region
        $region25: #{tpu_custom_call.1} parent=11 // pred_check
          %p276 = pneg %p132
        $region26: #{tpu_custom_call.1} parent=11 // pred_check_branch
          %278 = sbr.rel (%p276) target = $region28
        $region27: #{tpu_custom_call.1} parent=11 // pred_region
          _
        $region28: #{tpu_custom_call.1} parent=11 // pred_fallthru
          _
        // Predicated region
        $region29: #{tpu_custom_call.1} parent=11 // pred_check
          %p279 = pneg %p153
        $region30: #{tpu_custom_call.1} parent=11 // pred_check_branch
          %281 = sbr.rel (%p279) target = $region32
        $region31: #{tpu_custom_call.1} parent=11 // pred_region
          %s283 = ssub.s32 2048, 2048
          %284 = vsyncadd [#allocation6], %s283
          %s285 = sshll.u32 [#allocation7], 4
          %s286 = int_to_ptr.vmem [resolvable:$true] %s285
          %291 = dma.hbm_to_vmem [thread:$0]  %s5, 2048, %s286, [#allocation6], 64, 64, 4
        $region32: #{tpu_custom_call.1} parent=11 // pred_fallthru
          _
        // Predicated region
        $region33: #{tpu_custom_call.1} parent=11 // pred_check
          %p292 = pneg %p174
        $region34: #{tpu_custom_call.1} parent=11 // pred_check_branch
          %294 = sbr.rel (%p292) target = $region36
        $region35: #{tpu_custom_call.1} parent=11 // pred_region
          _
        $region36: #{tpu_custom_call.1} parent=11 // pred_fallthru
          _
        // Predicated region
        $region37: #{tpu_custom_call.1} parent=11 // pred_check
          %p295 = pneg %p195
        $region38: #{tpu_custom_call.1} parent=11 // pred_check_branch
          %297 = sbr.rel (%p295) target = $region40
        $region39: #{tpu_custom_call.1} parent=11 // pred_region
          _
        $region40: #{tpu_custom_call.1} parent=11 // pred_fallthru
          _
        // Predicated region
        $region41: #{tpu_custom_call.1} parent=11 // pred_check
          %p298 = pneg %p216
        $region42: #{tpu_custom_call.1} parent=11 // pred_check_branch
          %300 = sbr.rel (%p298) target = $region44
        $region43: #{tpu_custom_call.1} parent=11 // pred_region
          _
        $region44: #{tpu_custom_call.1} parent=11 // pred_fallthru
          _
      $region12: #{tpu_custom_call.1} parent=5 // pred_fallthru
        _
      %p301 = scmp.lt.s32.totalorder %s22, 2
      // Predicated region
      $region45: #{tpu_custom_call.1} parent=5 // pred_check
        %p302 = pneg %p301
      $region46: #{tpu_custom_call.1} parent=5 // pred_check_branch
        %304 = sbr.rel (%p302) target = $region48
      $region47: #{tpu_custom_call.1} parent=5 // pred_region
        // Predicated region
        $region49: #{tpu_custom_call.1} parent=47 // pred_check
          %p305 = pneg %p42
        $region50: #{tpu_custom_call.1} parent=47 // pred_check_branch
          %307 = sbr.rel (%p305) target = $region52
        $region51: #{tpu_custom_call.1} parent=47 // pred_region
          %s308 = sand.u32 %s32, 1
          %s309 = scalar_lea.sflag [#allocation3], %s308
          %s310 = sand.u32 %s32, 1
          %s311 = smul.addr %s310, 8
          %s312 = scalar_lea.vmem [#allocation2], %s311
          %s314 = ssub.s32 128, 128
          %315 = vsyncadd %s309, %s314
          %s316 = smul.addr %s22, 128
          %s317 = scalar_lea.hbm %s0, %s316
          %s319 = sshll.u32 %s312, 4
          %s320 = int_to_ptr.vmem [resolvable:$true] %s319
          %322 = dma.hbm_to_vmem [thread:$0]  %s317, 128, %s320, %s309
        $region52: #{tpu_custom_call.1} parent=47 // pred_fallthru
          _
      $region48: #{tpu_custom_call.1} parent=5 // pred_fallthru
        _
      %p323 = scmp.le.s32.totalorder 1, %s22
      %p324 = scmp.lt.s32.totalorder %s22, 3
      %p325 = pnand %p323, %p324
      %p326 = pneg %p325
      // Predicated region
      $region53: #{tpu_custom_call.1} parent=5 // pred_check
        _
      $region54: #{tpu_custom_call.1} parent=5 // pred_check_branch
        %328 = sbr.rel (%p325) target = $region56
      $region55: #{tpu_custom_call.1} parent=5 // pred_region
        %s329 = ssub.s32 %s22, 1
        %s330 = sand.u32 %s35, 1
        %s331 = scalar_lea.sflag [#allocation3], %s330
        %s332 = sand.u32 %s35, 1
        %s333 = smul.addr %s332, 8
        %s334 = scalar_lea.vmem [#allocation2], %s333
        // Predicated region
        $region57: #{tpu_custom_call.1} parent=55 // pred_check
          %p335 = pneg %p48
        $region58: #{tpu_custom_call.1} parent=55 // pred_check_branch
          %337 = sbr.rel (%p335) target = $region60
        $region59: #{tpu_custom_call.1} parent=55 // pred_region
          %338 = dma.done %s331, 128
        $region60: #{tpu_custom_call.1} parent=55 // pred_fallthru
          _
        // Predicated region
        $region61: #{tpu_custom_call.1} parent=55 // pred_check
          %p339 = pneg %p69
        $region62: #{tpu_custom_call.1} parent=55 // pred_check_branch
          %341 = sbr.rel (%p339) target = $region64
        $region63: #{tpu_custom_call.1} parent=55 // pred_region
          %342 = dma.done [#allocation6], 2048
        $region64: #{tpu_custom_call.1} parent=55 // pred_fallthru
          _
        // Predicated region
        $region65: #{tpu_custom_call.1} parent=55 // pred_check
          %p343 = pneg %p153
        $region66: #{tpu_custom_call.1} parent=55 // pred_check_branch
          %345 = sbr.rel (%p343) target = $region68
        $region67: #{tpu_custom_call.1} parent=55 // pred_region
          %346 = dma.done [#allocation6], 2048
        $region68: #{tpu_custom_call.1} parent=55 // pred_fallthru
          _
        %s347 = sand.u32 %s35, 1
        %s348 = scalar_lea.sflag [#allocation3], %s347
        %s349 = sand.u32 %s35, 1
        %s350 = smul.addr %s349, 8
        %s351 = scalar_lea.vmem [#allocation2], %s350
        %p352 = pneg %p48
        %p353 = pneg %p45
        %p354 = pneg %p69
        %p355 = pneg %p66
        %p356 = pneg %p90
        %p357 = pneg %p87
        %p358 = pneg %p111
        %p359 = pneg %p108
        %p360 = pneg %p132
        %p361 = pneg %p129
        %p362 = pneg %p153
        %p363 = pneg %p150
        %p364 = pneg %p174
        %p365 = pneg %p171
        %p366 = pneg %p195
        %p367 = pneg %p192
        %p368 = pneg %p216
        %p369 = pneg %p213
        %p370 = pneg %p242
        %p371 = pneg %p239
        %s372 = sand.u32 %s229, 1
        %s373 = scalar_lea.sflag [#allocation4], %s372
        %s374 = sand.u32 %s229, 1
        %s375 = smul.addr %s374, 8
        %s376 = scalar_lea.vmem [#allocation8], %s375
        %v378 = vld [vmem:[%s334] sm:$0xff]
        %v379 = vpack.c.bf16 %v378, %v378
        %v380 = vld [vmem:[#allocation5] sm:$0xff]
        %v381 = vld [vmem:[#allocation5 + $0x8] sm:$0xff]
        %v382 = vld [vmem:[#allocation5 + $0x10] sm:$0xff]
        %v383 = vld [vmem:[#allocation5 + $0x18] sm:$0xff]
        %v384 = vld [vmem:[#allocation5 + $0x20] sm:$0xff]
        %v385 = vld [vmem:[#allocation5 + $0x28] sm:$0xff]
        %v386 = vld [vmem:[#allocation5 + $0x30] sm:$0xff]
        %v387 = vld [vmem:[#allocation5 + $0x38] sm:$0xff]
        %v388 = vld [vmem:[#allocation5 + $0x40] sm:$0xff]
        %v389 = vld [vmem:[#allocation5 + $0x48] sm:$0xff]
        %v390 = vld [vmem:[#allocation5 + $0x50] sm:$0xff]
        %v391 = vld [vmem:[#allocation5 + $0x58] sm:$0xff]
        %v392 = vld [vmem:[#allocation5 + $0x60] sm:$0xff]
        %v393 = vld [vmem:[#allocation5 + $0x68] sm:$0xff]
        %v394 = vld [vmem:[#allocation5 + $0x70] sm:$0xff]
        %v395 = vld [vmem:[#allocation5 + $0x78] sm:$0xff]
        %v396 = vld [vmem:[%s2] sm:$0x3]
        %v398 = vlaneseq
        %v399 = vshrl.u32 %v398, 7
        %v400 = vsub.s32 0, %v399
        %v401 = vrot.slane %v396, %v400
        %v402 = vlaneseq
        %v403 = vshrl.u32 %v402, 7
        %v404 = vsub.s32 1, %v403
        %v405 = vrot.slane %v396, %v404
        %v424 = vunpack.c.l.b16 %v380
        %v425 = vunpack.c.h.b16 %v380
        %v426 = vunpack.c.l.b16 %v381
        %v427 = vunpack.c.h.b16 %v381
        %v428 = vunpack.c.l.b16 %v382
        %v429 = vunpack.c.h.b16 %v382
        %v430 = vunpack.c.l.b16 %v383
        %v431 = vunpack.c.h.b16 %v383
        %v432 = vunpack.c.l.b16 %v384
        %v433 = vunpack.c.h.b16 %v384
        %v434 = vunpack.c.l.b16 %v385
        %v435 = vunpack.c.h.b16 %v385
        %v436 = vunpack.c.l.b16 %v386
        %v437 = vunpack.c.h.b16 %v386
        %v438 = vunpack.c.l.b16 %v387
        %v439 = vunpack.c.h.b16 %v387
        %v440 = vunpack.c.l.b16 %v388
        %v441 = vunpack.c.h.b16 %v388
        %v442 = vunpack.c.l.b16 %v389
        %v443 = vunpack.c.h.b16 %v389
        %v444 = vunpack.c.l.b16 %v390
        %v445 = vunpack.c.h.b16 %v390
        %v446 = vunpack.c.l.b16 %v391
        %v447 = vunpack.c.h.b16 %v391
        %v448 = vunpack.c.l.b16 %v392
        %v449 = vunpack.c.h.b16 %v392
        %v450 = vunpack.c.l.b16 %v393
        %v451 = vunpack.c.h.b16 %v393
        %v452 = vunpack.c.l.b16 %v394
        %v453 = vunpack.c.h.b16 %v394
        %v454 = vunpack.c.l.b16 %v395
        %v455 = vunpack.c.h.b16 %v395
        %v456 = vpack.c.b16 %v426, %v424
        %v457 = vpack.c.b16 %v427, %v425
        %v458 = vpack.c.b16 %v430, %v428
        %v459 = vpack.c.b16 %v431, %v429
        %v460 = vpack.c.b16 %v434, %v432
        %v461 = vpack.c.b16 %v435, %v433
        %v462 = vpack.c.b16 %v438, %v436
        %v463 = vpack.c.b16 %v439, %v437
        %v464 = vpack.c.b16 %v442, %v440
        %v465 = vpack.c.b16 %v443, %v441
        %v466 = vpack.c.b16 %v446, %v444
        %v467 = vpack.c.b16 %v447, %v445
        %v468 = vpack.c.b16 %v450, %v448
        %v469 = vpack.c.b16 %v451, %v449
        %v470 = vpack.c.b16 %v454, %v452
        %v471 = vpack.c.b16 %v455, %v453
        %488 = vmatprep.subr.bf16.mxu0 %v457
        %489 = vmatpush1.bf16.msra.mxu0 %v456
        %490 = vmatprep.subr.bf16.mxu0 %v459
        %491 = vmatpush1.bf16.msra.mxu0 %v458
        %492 = vmatprep.subr.bf16.mxu0 %v461
        %493 = vmatpush1.bf16.msra.mxu0 %v460
        %494 = vmatprep.subr.bf16.mxu0 %v463
        %495 = vmatpush1.bf16.msra.mxu0 %v462
        %496 = vmatprep.subr.bf16.mxu0 %v465
        %497 = vmatpush1.bf16.msra.mxu0 %v464
        %498 = vmatprep.subr.bf16.mxu0 %v467
        %499 = vmatpush1.bf16.msra.mxu0 %v466
        %500 = vmatprep.subr.bf16.mxu0 %v469
        %501 = vmatpush1.bf16.msra.mxu0 %v468
        %502 = vmatprep.subr.bf16.mxu0 %v471
        %503 = vmatpush1.bf16.msra.mxu0 %v470
        %504 = vmatprep.subr.bf16.mxu0 0
        %505 = vmatpush1.bf16.msra.mxu0 0
        %506 = vmatprep.subr.bf16.mxu0 0
        %507 = vmatpush1.bf16.msra.mxu0 0
        %508 = vmatprep.subr.bf16.mxu0 0
        %509 = vmatpush1.bf16.msra.mxu0 0
        %510 = vmatprep.subr.bf16.mxu0 0
        %511 = vmatpush1.bf16.msra.mxu0 0
        %512 = vmatprep.subr.bf16.mxu0 0
        %513 = vmatpush1.bf16.msra.mxu0 0
        %514 = vmatprep.subr.bf16.mxu0 0
        %515 = vmatpush1.bf16.msra.mxu0 0
        %516 = vmatprep.subr.bf16.mxu0 0
        %517 = vmatpush1.bf16.msra.mxu0 0
        %518 = vmatprep.subr.bf16.mxu0 0
        %519 = vmatpush1.bf16.msra.mxu0 0
        %520 = vmatprep.mubr.bf16.mxu0 0
        %521 = vmatmul.mubr.bf16.gmra.mrb[0].mxu0 %v379
        %v522 = vpop.f32.mrb[0].mxu0
        %v523 = vadd.f32 %v401, %v522
        %v524 = vpop.f32.mrb[0].mxu0
        %v525 = vadd.f32 %v405, %v524
        %v526 = vpop.f32.mrb[0].mxu0
        %v527 = vpop.f32.mrb[0].mxu0
        %528 = vdwg.mxu0
        %v529 = vld [vmem:[%s3] sm:$0x3]
        %v530 = vld [vmem:[%s4] sm:$0x3]
        %v531 = vadd.f32 %v523, %v525
        %532 = vadd.xlane.f32.xlu0 %v531
        %v533 = vpop.xlane.xlu0 %532
        %v534 = vrcp.pop 256.0
        %v535 = vmul.f32 %v533, %v534
        %v536 = vsub.f32 %v523, %v535
        %v537 = vsub.f32 %v525, %v535
        %v538 = vmul.f32 %v536, %v536
        %v539 = vmul.f32 %v537, %v537
        %v540 = vadd.f32 %v538, %v539
        %541 = vadd.xlane.f32.xlu0 %v540
        %v542 = vpop.xlane.xlu0 %541
        %v543 = vmul.f32 %v542, %v534
        %v544 = vadd.f32 %v543, 1e-05
        %v545 = vrsqrt.pop %v544
        %v546 = vmul.f32 %v536, %v545
        %v547 = vmul.f32 %v537, %v545
        %v549 = vlaneseq
        %v550 = vshrl.u32 %v549, 7
        %v551 = vsub.s32 0, %v550
        %v552 = vrot.slane %v529, %v551
        %v553 = vlaneseq
        %v554 = vshrl.u32 %v553, 7
        %v555 = vsub.s32 1, %v554
        %v556 = vrot.slane %v529, %v555
        %v559 = vmul.f32 %v546, %v552
        %v560 = vmul.f32 %v547, %v556
        %v562 = vlaneseq
        %v563 = vshrl.u32 %v562, 7
        %v564 = vsub.s32 0, %v563
        %v565 = vrot.slane %v530, %v564
        %v566 = vlaneseq
        %v567 = vshrl.u32 %v566, 7
        %v568 = vsub.s32 1, %v567
        %v569 = vrot.slane %v530, %v568
        %v572 = vadd.f32 %v559, %v565
        %v573 = vadd.f32 %v560, %v569
        %v574 = vxor.u32 %v572, 2147483648
        %v575 = vxor.u32 %v573, 2147483648
        %v576 = vmul.f32 %v574, 1.442695
        %v577 = vpow.pop %v576
        %v578 = vmul.f32 %v575, 1.442695
        %v579 = vpow.pop %v578
        %v580 = vadd.f32 %v577, 1.0
        %v581 = vadd.f32 %v579, 1.0
        %v582 = vrcp.pop %v580
        %v583 = vmul.f32 1.0, %v582
        %v584 = vrcp.pop %v581
        %v585 = vmul.f32 1.0, %v584
        %v586 = vmul.f32 %v572, %v583
        %v587 = vmul.f32 %v573, %v585
        %v588 = vpack.c.bf16 %v586, %v586
        %v589 = vpack.c.bf16 %v587, %v587
        %v590 = vld [vmem:[#allocation7] sm:$0xf]
        %v591 = vld [vmem:[#allocation7 + $0x4] sm:$0xf]
        %v592 = vld [vmem:[#allocation7 + $0x8] sm:$0xf]
        %v593 = vld [vmem:[#allocation7 + $0xc] sm:$0xf]
        %v594 = vld [vmem:[#allocation7 + $0x10] sm:$0xf]
        %v595 = vld [vmem:[#allocation7 + $0x14] sm:$0xf]
        %v596 = vld [vmem:[#allocation7 + $0x18] sm:$0xf]
        %v597 = vld [vmem:[#allocation7 + $0x1c] sm:$0xf]
        %v598 = vld [vmem:[#allocation7 + $0x20] sm:$0xf]
        %v599 = vld [vmem:[#allocation7 + $0x24] sm:$0xf]
        %v600 = vld [vmem:[#allocation7 + $0x28] sm:$0xf]
        %v601 = vld [vmem:[#allocation7 + $0x2c] sm:$0xf]
        %v602 = vld [vmem:[#allocation7 + $0x30] sm:$0xf]
        %v603 = vld [vmem:[#allocation7 + $0x34] sm:$0xf]
        %v604 = vld [vmem:[#allocation7 + $0x38] sm:$0xf]
        %v605 = vld [vmem:[#allocation7 + $0x3c] sm:$0xf]
        %v606 = vld [vmem:[#allocation7 + $0x40] sm:$0xf]
        %v607 = vld [vmem:[#allocation7 + $0x44] sm:$0xf]
        %v608 = vld [vmem:[#allocation7 + $0x48] sm:$0xf]
        %v609 = vld [vmem:[#allocation7 + $0x4c] sm:$0xf]
        %v610 = vld [vmem:[#allocation7 + $0x50] sm:$0xf]
        %v611 = vld [vmem:[#allocation7 + $0x54] sm:$0xf]
        %v612 = vld [vmem:[#allocation7 + $0x58] sm:$0xf]
        %v613 = vld [vmem:[#allocation7 + $0x5c] sm:$0xf]
        %v614 = vld [vmem:[#allocation7 + $0x60] sm:$0xf]
        %v615 = vld [vmem:[#allocation7 + $0x64] sm:$0xf]
        %v616 = vld [vmem:[#allocation7 + $0x68] sm:$0xf]
        %v617 = vld [vmem:[#allocation7 + $0x6c] sm:$0xf]
        %v618 = vld [vmem:[#allocation7 + $0x70] sm:$0xf]
        %v619 = vld [vmem:[#allocation7 + $0x74] sm:$0xf]
        %v620 = vld [vmem:[#allocation7 + $0x78] sm:$0xf]
        %v621 = vld [vmem:[#allocation7 + $0x7c] sm:$0xf]
        %v622 = vld [vmem:[%s6] sm:$0x1]
        %v624 = vlaneseq
        %v625 = vshrl.u32 %v624, 7
        %v626 = vsub.s32 0, %v625
        %v627 = vrot.slane %v622, %v626
        %v661 = vunpack.c.l.b16 %v590
        %v662 = vunpack.c.l.b16 %v591
        %v663 = vunpack.c.l.b16 %v592
        %v664 = vunpack.c.l.b16 %v593
        %v665 = vunpack.c.l.b16 %v594
        %v666 = vunpack.c.l.b16 %v595
        %v667 = vunpack.c.l.b16 %v596
        %v668 = vunpack.c.l.b16 %v597
        %v669 = vunpack.c.l.b16 %v598
        %v670 = vunpack.c.l.b16 %v599
        %v671 = vunpack.c.l.b16 %v600
        %v672 = vunpack.c.l.b16 %v601
        %v673 = vunpack.c.l.b16 %v602
        %v674 = vunpack.c.l.b16 %v603
        %v675 = vunpack.c.l.b16 %v604
        %v676 = vunpack.c.l.b16 %v605
        %v677 = vunpack.c.l.b16 %v606
        %v678 = vunpack.c.l.b16 %v607
        %v679 = vunpack.c.l.b16 %v608
        %v680 = vunpack.c.l.b16 %v609
        %v681 = vunpack.c.l.b16 %v610
        %v682 = vunpack.c.l.b16 %v611
        %v683 = vunpack.c.l.b16 %v612
        %v684 = vunpack.c.l.b16 %v613
        %v685 = vunpack.c.l.b16 %v614
        %v686 = vunpack.c.l.b16 %v615
        %v687 = vunpack.c.l.b16 %v616
        %v688 = vunpack.c.l.b16 %v617
        %v689 = vunpack.c.l.b16 %v618
        %v690 = vunpack.c.l.b16 %v619
        %v691 = vunpack.c.l.b16 %v620
        %v692 = vunpack.c.l.b16 %v621
        %v693 = vpack.c.b16 %v662, %v661
        %v694 = vpack.c.b16 %v664, %v663
        %v695 = vpack.c.b16 %v666, %v665
        %v696 = vpack.c.b16 %v668, %v667
        %v697 = vpack.c.b16 %v670, %v669
        %v698 = vpack.c.b16 %v672, %v671
        %v699 = vpack.c.b16 %v674, %v673
        %v700 = vpack.c.b16 %v676, %v675
        %v701 = vpack.c.b16 %v678, %v677
        %v702 = vpack.c.b16 %v680, %v679
        %v703 = vpack.c.b16 %v682, %v681
        %v704 = vpack.c.b16 %v684, %v683
        %v705 = vpack.c.b16 %v686, %v685
        %v706 = vpack.c.b16 %v688, %v687
        %v707 = vpack.c.b16 %v690, %v689
        %v708 = vpack.c.b16 %v692, %v691
        %725 = vmatprep.subr.bf16.mxu0 0
        %726 = vmatpush1.bf16.msra.mxu0 %v693
        %727 = vmatprep.subr.bf16.mxu0 0
        %728 = vmatpush1.bf16.msra.mxu0 %v694
        %729 = vmatprep.subr.bf16.mxu0 0
        %730 = vmatpush1.bf16.msra.mxu0 %v695
        %731 = vmatprep.subr.bf16.mxu0 0
        %732 = vmatpush1.bf16.msra.mxu0 %v696
        %733 = vmatprep.subr.bf16.mxu0 0
        %734 = vmatpush1.bf16.msra.mxu0 %v697
        %735 = vmatprep.subr.bf16.mxu0 0
        %736 = vmatpush1.bf16.msra.mxu0 %v698
        %737 = vmatprep.subr.bf16.mxu0 0
        %738 = vmatpush1.bf16.msra.mxu0 %v699
        %739 = vmatprep.subr.bf16.mxu0 0
        %740 = vmatpush1.bf16.msra.mxu0 %v700
        %741 = vmatprep.subr.bf16.mxu0 0
        %742 = vmatpush1.bf16.msra.mxu0 %v701
        %743 = vmatprep.subr.bf16.mxu0 0
        %744 = vmatpush1.bf16.msra.mxu0 %v702
        %745 = vmatprep.subr.bf16.mxu0 0
        %746 = vmatpush1.bf16.msra.mxu0 %v703
        %747 = vmatprep.subr.bf16.mxu0 0
        %748 = vmatpush1.bf16.msra.mxu0 %v704
        %749 = vmatprep.subr.bf16.mxu0 0
        %750 = vmatpush1.bf16.msra.mxu0 %v705
        %751 = vmatprep.subr.bf16.mxu0 0
        %752 = vmatpush1.bf16.msra.mxu0 %v706
        %753 = vmatprep.subr.bf16.mxu0 0
        %754 = vmatpush1.bf16.msra.mxu0 %v707
        %755 = vmatprep.subr.bf16.mxu0 0
        %756 = vmatpush1.bf16.msra.mxu0 %v708
        %757 = vmatprep.mubr.bf16.mxu0 %v589
        %758 = vmatmul.mubr.bf16.gmra.mrb[0].mxu0 %v588
        %v759 = vpop.f32.mrb[0].mxu0
        %v760 = vadd.f32 %v627, %v759
        %v761 = vpop.f32.mrb[0].mxu0
        %v762 = vpop.f32.mrb[0].mxu0
        %v763 = vpop.f32.mrb[0].mxu0
        %764 = vdwg.mxu0
        %v765 = vld [vmem:[%s7] sm:$0x1]
        %v766 = vld [vmem:[%s8] sm:$0x1]
        %767 = vadd.xlane.f32.xlu0 %v760
        %v768 = vpop.xlane.xlu0 %767
        %v769 = vrcp.pop 128.0
        %v770 = vmul.f32 %v768, %v769
        %v771 = vsub.f32 %v760, %v770
        %v772 = vmul.f32 %v771, %v771
        %773 = vadd.xlane.f32.xlu0 %v772
        %v774 = vpop.xlane.xlu0 %773
        %v775 = vmul.f32 %v774, %v769
        %v776 = vadd.f32 %v775, 1e-05
        %v777 = vrsqrt.pop %v776
        %v778 = vmul.f32 %v771, %v777
        %v780 = vlaneseq
        %v781 = vshrl.u32 %v780, 7
        %v782 = vsub.s32 0, %v781
        %v783 = vrot.slane %v765, %v782
        %v785 = vmul.f32 %v778, %v783
        %v787 = vlaneseq
        %v788 = vshrl.u32 %v787, 7
        %v789 = vsub.s32 0, %v788
        %v790 = vrot.slane %v766, %v789
        %v792 = vadd.f32 %v785, %v790
        %793 = vst [vmem:[%s376] sm:$0xff] %v792
        %s794 = sand.u32 %s229, 1
        %s795 = scalar_lea.sflag [#allocation4], %s794
        %s796 = sand.u32 %s229, 1
        %s797 = smul.addr %s796, 8
        %s798 = scalar_lea.vmem [#allocation8], %s797
        // Predicated region
        $region69: #{tpu_custom_call.1} parent=55 // pred_check
          %p799 = pneg %p239
        $region70: #{tpu_custom_call.1} parent=55 // pred_check_branch
          %801 = sbr.rel (%p799) target = $region72
        $region71: #{tpu_custom_call.1} parent=55 // pred_region
          %s803 = ssub.s32 128, 128
          %804 = vsyncadd %s795, %s803
          %s805 = smul.addr %s27, 128
          %s806 = scalar_lea.hbm %s9, %s805
          %s808 = sshll.u32 %s798, 4
          %s809 = int_to_ptr.vmem [resolvable:$true] %s808
          %811 = dma.vmem_to_hbm [thread:$0]  %s809, 128, %s806, %s795
        $region72: #{tpu_custom_call.1} parent=55 // pred_fallthru
          _
      $region56: #{tpu_custom_call.1} parent=5 // pred_fallthru
        _
      %p812 = scmp.le.s32.totalorder 2, %s22
      // Predicated region
      $region73: #{tpu_custom_call.1} parent=5 // pred_check
        %p813 = pneg %p812
      $region74: #{tpu_custom_call.1} parent=5 // pred_check_branch
        %815 = sbr.rel (%p813) target = $region76
      $region75: #{tpu_custom_call.1} parent=5 // pred_region
        %s816 = ssub.s32 %s22, 2
        // Predicated region
        $region77: #{tpu_custom_call.1} parent=75 // pred_check
          %p817 = pneg %p245
        $region78: #{tpu_custom_call.1} parent=75 // pred_check_branch
          %819 = sbr.rel (%p817) target = $region80
        $region79: #{tpu_custom_call.1} parent=75 // pred_region
          %s820 = sand.u32 %s230, 1
          %s821 = scalar_lea.sflag [#allocation4], %s820
          %s822 = sand.u32 %s230, 1
          %s823 = smul.addr %s822, 8
          %s824 = scalar_lea.vmem [#allocation8], %s823
          %825 = dma.done %s821, 128
        $region80: #{tpu_custom_call.1} parent=75 // pred_fallthru
          _
      $region76: #{tpu_custom_call.1} parent=5 // pred_fallthru
        _
    $region6: #{tpu_custom_call.1} parent=1 // loop_footer
      %s26 = sadd.s32 1, %s22
    $region7: #{tpu_custom_call.1} parent=1 // loop_footer_branch
      %21 = sbr.rel target = $region3
    $region8: #{tpu_custom_call.1} parent=1 // loop_exit
      _
    %826 = vsyncpa [#allocation3], 1
    %s827 = scalar_lea.sflag [#allocation3], 1
    %828 = vsyncpa %s827, 1
    %829 = vsyncpa [#allocation6], 1
    %830 = vsyncpa [#allocation4], 1
    %s831 = scalar_lea.sflag [#allocation4], 1
    %832 = vsyncpa %s831, 1

</llo_original>
